<compile_context>
chip_gen: v7x
topology: tpu7x:2x2x1
jax: 0.10.0
libtpu: 0.0.40
codegen_flags: <defaults>
</compile_context>

<pallas_src>
import functools

import jax
import jax.numpy as jnp
from jax.experimental import pallas as pl
from jax.experimental.pallas import tpu as pltpu


def _fused_block_kernel(x_ref, w1_ref, b1_ref, w2_ref, b2_ref, out_ref, *, width):
    # x_ref  : (Bblk, C, H*W) f32   NCHW-flat input (spatial on lanes)
    # w*_ref : (C, 9*C)       bf16  columns ordered (ky, kx, c_in)
    # b*_ref : (C, 1)         f32
    # out_ref: (Bblk, C, H*W) f32   NCHW-flat output (lane-dense stores)
    bblk, c, hw = out_ref.shape
    pad = width + 1                      # leading/trailing zero lanes of the map
    plen = hw + 2 * pad                  # = H*W + 2*W + 2

    # Lane-index masks, built once per grid step (JAX does not CSE broadcasts).
    # kill_left  zeroes P[:, W-1] (read spuriously by kx=0 taps at x=0)
    # kill_right zeroes P[:, 0]   (read spuriously by kx=2 taps at x=W-1)
    lane = jax.lax.broadcasted_iota(jnp.int32, (c, plen), 1)
    kill_left = (lane % width) == 0
    kill_right = (lane % width) == 1

    w1 = w1_ref[...]
    w2 = w2_ref[...]
    b1 = b1_ref[...]
    b2 = b2_ref[...]

    def conv3x3(x_f32, w_mat, b):
        # Rows-only zero-padded, flattened CHW map built in registers:
        #   pf[c, pad + f] = x[c, f],  f = y*W + x  (no HBM pad, no VMEM memset)
        xb = x_f32.astype(jnp.bfloat16)
        z = jnp.zeros((c, pad), jnp.bfloat16)
        pf = jnp.concatenate([z, xb, z], axis=-1)            # (C, plen)
        zf = jnp.zeros_like(pf)
        srcs = (jnp.where(kill_left, zf, pf),                 # source for kx = 0
                pf,                                           # source for kx = 1
                jnp.where(kill_right, zf, pf))                # source for kx = 2
        # Tap (ky, kx) at output f reads pf[f + ky*W + kx]: a static lane shift
        # (XLU).  Concatenate the 9 taps into one (9C, HW) slab so the whole
        # K = 9C contraction stays inside the MXU.
        taps = [srcs[kx][:, ky * width + kx: ky * width + kx + hw]
                for ky in range(3) for kx in range(3)]
        patch = jnp.concatenate(taps, axis=0)                 # (9C, HW) bf16
        # Transposed GEMM: N = HW is fully lane-dense -> unmasked epilogue vst.
        acc = jnp.dot(w_mat, patch, preferred_element_type=jnp.float32)
        return acc + b                                        # (C, HW) f32

    for bi in range(bblk):               # static unroll over the batch block
        x = x_ref[bi]                                          # (C, HW) f32
        h = jnp.maximum(conv3x3(x, w1, b1), 0.0)               # conv1 + ReLU
        h = jnp.maximum(conv3x3(h, w2, b2), 0.0)               # conv2 + ReLU
        out_ref[bi] = (h + x).astype(out_ref.dtype)            # + residual


def basic_block1_forward(x_nchw, params, block_b=None):
    """Forward of BasicBlock1. x_nchw: (B, C, H, W) float32 (PyTorch layout)."""
    w1, b1, w2, b2 = params              # w*: (C, 9*C) f32, b*: (C,)
    B, C, H, W = x_nchw.shape
    HW = H * W

    if block_b is None:
        # Fatter blocks for large B (amortize per-step overhead); for small B
        # keep grid length >= 2 so both v7x TensorCores get a step.
        block_b = max(1, B // 8)
    while B % block_b:
        block_b -= 1
    grid = (B // block_b,)

    x_flat = x_nchw.reshape(B, C, HW)    # contiguous -> free bitcast, no HBM copy
    w1b = w1.astype(jnp.bfloat16)        # bf16 MXU operands (f32 accumulate)
    w2b = w2.astype(jnp.bfloat16)
    b1c = b1.reshape(C, 1)
    b2c = b2.reshape(C, 1)

    kernel = functools.partial(_fused_block_kernel, width=W)
    out = pl.pallas_call(
        kernel,
        out_shape=jax.ShapeDtypeStruct((B, C, HW), x_nchw.dtype),
        grid=grid,
        in_specs=[
            pl.BlockSpec((block_b, C, HW), lambda i: (i, 0, 0)),  # x (NCHW-flat)
            pl.BlockSpec((C, 9 * C), lambda i: (0, 0)),           # w1 (resident)
            pl.BlockSpec((C, 1), lambda i: (0, 0)),               # b1
            pl.BlockSpec((C, 9 * C), lambda i: (0, 0)),           # w2 (resident)
            pl.BlockSpec((C, 1), lambda i: (0, 0)),               # b2
        ],
        out_specs=pl.BlockSpec((block_b, C, HW), lambda i: (i, 0, 0)),
        # Blocks are tiny here (~tens of KiB); when H*W*C scales, re-derive
        # block_b against v7x's 64 MiB VMEM and set vmem_limit_bytes explicitly.
        compiler_params=pltpu.CompilerParams(
            dimension_semantics=("parallel",)),
    )(x_flat, w1b, b1c, w2b, b2c)

    return out.reshape(B, C, H, W)       # free bitcast back to NCHW


def init_params(key, planes):
    """nn.init.normal_(std=0.01) weights, zero bias. Returns kernel-layout
    weights (C_out, 9*C_in) plus the original OIHW tensors for the reference."""
    k1, k2 = jax.random.split(key)
    w1_oihw = 0.01 * jax.random.normal(k1, (planes, planes, 3, 3), jnp.float32)
    w2_oihw = 0.01 * jax.random.normal(k2, (planes, planes, 3, 3), jnp.float32)
    b1 = jnp.zeros((planes,), jnp.float32)
    b2 = jnp.zeros((planes,), jnp.float32)

    def to_kernel_layout(w_oihw):
        # (O, I, ky, kx) -> (O, ky, kx, I) -> (O, 9*I); col = (3*ky+kx)*I + i
        return jnp.transpose(w_oihw, (0, 2, 3, 1)).reshape(planes, 9 * planes)

    return (to_kernel_layout(w1_oihw), b1, to_kernel_layout(w2_oihw), b2,
            w1_oihw, w2_oihw)


def _reference(x_nchw, w1_oihw, b1, w2_oihw, b2):
    dn = ("NCHW", "OIHW", "NCHW")
    out = jax.lax.conv_general_dilated(x_nchw, w1_oihw, (1, 1), "SAME",
                                       dimension_numbers=dn)
    out = jnp.maximum(out + b1[None, :, None, None], 0.0)
    out = jax.lax.conv_general_dilated(out, w2_oihw, (1, 1), "SAME",
                                       dimension_numbers=dn)
    out = jnp.maximum(out + b2[None, :, None, None], 0.0)
    return out + x_nchw


if __name__ == "__main__":
    planes = 32
    B, H, W = 2, 16, 16

    key = jax.random.PRNGKey(0)
    kx_, kp = jax.random.split(key)
    x = jax.random.normal(kx_, (B, planes, H, W), jnp.float32)
    w1, b1, w2, b2, w1_oihw, w2_oihw = init_params(kp, planes)

    out = basic_block1_forward(x, (w1, b1, w2, b2))
    out = jax.block_until_ready(out)

    ref = _reference(x, w1_oihw, b1, w2_oihw, b2)
    max_err = float(jnp.max(jnp.abs(out - ref)))
    assert out.shape == x.shape and out.dtype == x.dtype
    # bf16 matmul operands (f32 accumulate) vs f32 reference -> loosened tolerance.
    assert max_err < 2e-2, f"max abs err {max_err}"

    print("KERNEL_OK")
</pallas_src>

<mosaic_0001>
module attributes {stable_mosaic.version = 11 : i64} {
  func.func @_fused_block_kernel(%arg0: i32, %arg1: memref<1x32x256xf32, #tpu.memory_space<vmem>>, %arg2: memref<32x288xbf16, #tpu.memory_space<vmem>>, %arg3: memref<32x1xf32, #tpu.memory_space<vmem>>, %arg4: memref<32x288xbf16, #tpu.memory_space<vmem>>, %arg5: memref<32x1xf32, #tpu.memory_space<vmem>>, %arg6: memref<1x32x256xf32, #tpu.memory_space<vmem>>) attributes {dimension_semantics = [#tpu.dimension_semantics<parallel>], iteration_bounds = array<i64: 2>, scalar_prefetch = 0 : i64, scratch_operands = 0 : i64, tpu.core_type = #tpu.core_type<tc>, window_params = [{transform_indices = @transform_0, window_bounds = array<i64: 1, 32, 256>}, {pipeline_mode = #tpu.pipeline_mode<synchronous>, transform_indices = @transform_1, window_bounds = array<i64: 32, 288>}, {pipeline_mode = #tpu.pipeline_mode<synchronous>, transform_indices = @transform_2, window_bounds = array<i64: 32, 1>}, {pipeline_mode = #tpu.pipeline_mode<synchronous>, transform_indices = @transform_3, window_bounds = array<i64: 32, 288>}, {pipeline_mode = #tpu.pipeline_mode<synchronous>, transform_indices = @transform_4, window_bounds = array<i64: 32, 1>}, {transform_indices = @transform_5, window_bounds = array<i64: 1, 32, 256>}]} {
    %0 = tpu.iota {dimensions = array<i32: 1>} : vector<32x290xi32>
    %c16_i32 = arith.constant 16 : i32
    %c0_i32 = arith.constant 0 : i32
    %1 = arith.cmpi eq, %c16_i32, %c0_i32 : i32
    %c1_i32 = arith.constant 1 : i32
    %2 = arith.select %1, %c1_i32, %c16_i32 : i32
    %3 = vector.broadcast %2 : i32 to vector<32x290xi32>
    %4 = arith.remsi %0, %3 : vector<32x290xi32>
    %c0_i32_0 = arith.constant 0 : i32
    %5 = vector.broadcast %c0_i32_0 : i32 to vector<32x290xi32>
    %6 = arith.cmpi ne, %4, %5 : vector<32x290xi32>
    %c0_i32_1 = arith.constant 0 : i32
    %7 = vector.broadcast %c0_i32_1 : i32 to vector<32x290xi32>
    %8 = arith.cmpi slt, %4, %7 : vector<32x290xi32>
    %c0_i32_2 = arith.constant 0 : i32
    %9 = arith.cmpi slt, %2, %c0_i32_2 : i32
    %10 = vector.broadcast %9 : i1 to vector<32x290xi1>
    %11 = vector.broadcast %10 : vector<32x290xi1> to vector<32x290xi1>
    %12 = arith.xori %8, %11 : vector<32x290xi1>
    %13 = arith.andi %12, %6 : vector<32x290xi1>
    %14 = vector.broadcast %2 : i32 to vector<32x290xi32>
    %15 = arith.addi %4, %14 : vector<32x290xi32>
    %16 = arith.select %13, %15, %4 : vector<32x290xi1>, vector<32x290xi32>
    %c0_i32_3 = arith.constant 0 : i32
    %17 = vector.broadcast %c0_i32_3 : i32 to vector<32x290xi32>
    %18 = arith.cmpi eq, %16, %17 : vector<32x290xi32>
    %c16_i32_4 = arith.constant 16 : i32
    %c0_i32_5 = arith.constant 0 : i32
    %19 = arith.cmpi eq, %c16_i32_4, %c0_i32_5 : i32
    %c1_i32_6 = arith.constant 1 : i32
    %20 = arith.select %19, %c1_i32_6, %c16_i32_4 : i32
    %21 = vector.broadcast %20 : i32 to vector<32x290xi32>
    %22 = arith.remsi %0, %21 : vector<32x290xi32>
    %c0_i32_7 = arith.constant 0 : i32
    %23 = vector.broadcast %c0_i32_7 : i32 to vector<32x290xi32>
    %24 = arith.cmpi ne, %22, %23 : vector<32x290xi32>
    %c0_i32_8 = arith.constant 0 : i32
    %25 = vector.broadcast %c0_i32_8 : i32 to vector<32x290xi32>
    %26 = arith.cmpi slt, %22, %25 : vector<32x290xi32>
    %c0_i32_9 = arith.constant 0 : i32
    %27 = arith.cmpi slt, %20, %c0_i32_9 : i32
    %28 = vector.broadcast %27 : i1 to vector<32x290xi1>
    %29 = vector.broadcast %28 : vector<32x290xi1> to vector<32x290xi1>
    %30 = arith.xori %26, %29 : vector<32x290xi1>
    %31 = arith.andi %30, %24 : vector<32x290xi1>
    %32 = vector.broadcast %20 : i32 to vector<32x290xi32>
    %33 = arith.addi %22, %32 : vector<32x290xi32>
    %34 = arith.select %31, %33, %22 : vector<32x290xi1>, vector<32x290xi32>
    %c1_i32_10 = arith.constant 1 : i32
    %35 = vector.broadcast %c1_i32_10 : i32 to vector<32x290xi32>
    %36 = arith.cmpi eq, %34, %35 : vector<32x290xi32>
    %c0 = arith.constant 0 : index
    %c0_11 = arith.constant 0 : index
    %37 = vector.load %arg2[%c0, %c0_11] : memref<32x288xbf16, #tpu.memory_space<vmem>>, vector<32x288xbf16>
    %c0_12 = arith.constant 0 : index
    %c0_13 = arith.constant 0 : index
    %38 = vector.load %arg4[%c0_12, %c0_13] : memref<32x288xbf16, #tpu.memory_space<vmem>>, vector<32x288xbf16>
    %c0_14 = arith.constant 0 : index
    %c0_15 = arith.constant 0 : index
    %39 = vector.load %arg3[%c0_14, %c0_15] : memref<32x1xf32, #tpu.memory_space<vmem>>, vector<32x1xf32>
    %c0_16 = arith.constant 0 : index
    %c0_17 = arith.constant 0 : index
    %40 = vector.load %arg5[%c0_16, %c0_17] : memref<32x1xf32, #tpu.memory_space<vmem>>, vector<32x1xf32>
    %c0_18 = arith.constant 0 : index
    %c0_19 = arith.constant 0 : index
    %c0_20 = arith.constant 0 : index
    %41 = vector.load %arg1[%c0_18, %c0_19, %c0_20] : memref<1x32x256xf32, #tpu.memory_space<vmem>>, vector<1x32x256xf32>
    %42 = vector.shape_cast %41 : vector<1x32x256xf32> to vector<32x256xf32>
    %43 = arith.truncf %42 : vector<32x256xf32> to vector<32x256xbf16>
    %cst = arith.constant 0.000000e+00 : bf16
    %44 = vector.broadcast %cst : bf16 to vector<32x17xbf16>
    %45 = tpu.concatenate %44, %43, %44 in 1 : vector<32x17xbf16>, vector<32x256xbf16>, vector<32x17xbf16> -> vector<32x290xbf16>
    %cst_21 = arith.constant 0.000000e+00 : bf16
    %46 = vector.broadcast %cst_21 : bf16 to vector<32x290xbf16>
    %47 = arith.select %18, %46, %45 : vector<32x290xi1>, vector<32x290xbf16>
    %48 = arith.select %36, %46, %45 : vector<32x290xi1>, vector<32x290xbf16>
    %49 = vector.extract_strided_slice %47 {offsets = [0, 0], sizes = [32, 256], strides = [1, 1]} : vector<32x290xbf16> to vector<32x256xbf16>
    %50 = vector.extract_strided_slice %45 {offsets = [0, 1], sizes = [32, 256], strides = [1, 1]} : vector<32x290xbf16> to vector<32x256xbf16>
    %51 = vector.extract_strided_slice %48 {offsets = [0, 2], sizes = [32, 256], strides = [1, 1]} : vector<32x290xbf16> to vector<32x256xbf16>
    %52 = vector.extract_strided_slice %47 {offsets = [0, 16], sizes = [32, 256], strides = [1, 1]} : vector<32x290xbf16> to vector<32x256xbf16>
    %53 = vector.extract_strided_slice %45 {offsets = [0, 17], sizes = [32, 256], strides = [1, 1]} : vector<32x290xbf16> to vector<32x256xbf16>
    %54 = vector.extract_strided_slice %48 {offsets = [0, 18], sizes = [32, 256], strides = [1, 1]} : vector<32x290xbf16> to vector<32x256xbf16>
    %55 = vector.extract_strided_slice %47 {offsets = [0, 32], sizes = [32, 256], strides = [1, 1]} : vector<32x290xbf16> to vector<32x256xbf16>
    %56 = vector.extract_strided_slice %45 {offsets = [0, 33], sizes = [32, 256], strides = [1, 1]} : vector<32x290xbf16> to vector<32x256xbf16>
    %57 = vector.extract_strided_slice %48 {offsets = [0, 34], sizes = [32, 256], strides = [1, 1]} : vector<32x290xbf16> to vector<32x256xbf16>
    %58 = tpu.concatenate %49, %50, %51, %52, %53, %54, %55, %56, %57 in 0 : vector<32x256xbf16>, vector<32x256xbf16>, vector<32x256xbf16>, vector<32x256xbf16>, vector<32x256xbf16>, vector<32x256xbf16>, vector<32x256xbf16>, vector<32x256xbf16>, vector<32x256xbf16> -> vector<288x256xbf16>
    %cst_22 = arith.constant dense<0.000000e+00> : vector<32x256xf32>
    %59 = tpu.matmul %37, %58, %cst_22 {dimension_numbers = #tpu.dot_dimension_numbers<[1], [0], [0], [1], [0, 0, 1, 1], [], []>} : vector<32x288xbf16>, vector<288x256xbf16>, vector<32x256xf32> -> vector<32x256xf32>
    %60 = vector.broadcast %39 : vector<32x1xf32> to vector<32x256xf32>
    %61 = arith.addf %59, %60 : vector<32x256xf32>
    %cst_23 = arith.constant 0.000000e+00 : f32
    %62 = vector.broadcast %cst_23 : f32 to vector<32x256xf32>
    %63 = arith.maximumf %61, %62 : vector<32x256xf32>
    %64 = arith.truncf %63 : vector<32x256xf32> to vector<32x256xbf16>
    %cst_24 = arith.constant 0.000000e+00 : bf16
    %65 = vector.broadcast %cst_24 : bf16 to vector<32x17xbf16>
    %66 = tpu.concatenate %65, %64, %65 in 1 : vector<32x17xbf16>, vector<32x256xbf16>, vector<32x17xbf16> -> vector<32x290xbf16>
    %cst_25 = arith.constant 0.000000e+00 : bf16
    %67 = vector.broadcast %cst_25 : bf16 to vector<32x290xbf16>
    %68 = arith.select %18, %67, %66 : vector<32x290xi1>, vector<32x290xbf16>
    %69 = arith.select %36, %67, %66 : vector<32x290xi1>, vector<32x290xbf16>
    %70 = vector.extract_strided_slice %68 {offsets = [0, 0], sizes = [32, 256], strides = [1, 1]} : vector<32x290xbf16> to vector<32x256xbf16>
    %71 = vector.extract_strided_slice %66 {offsets = [0, 1], sizes = [32, 256], strides = [1, 1]} : vector<32x290xbf16> to vector<32x256xbf16>
    %72 = vector.extract_strided_slice %69 {offsets = [0, 2], sizes = [32, 256], strides = [1, 1]} : vector<32x290xbf16> to vector<32x256xbf16>
    %73 = vector.extract_strided_slice %68 {offsets = [0, 16], sizes = [32, 256], strides = [1, 1]} : vector<32x290xbf16> to vector<32x256xbf16>
    %74 = vector.extract_strided_slice %66 {offsets = [0, 17], sizes = [32, 256], strides = [1, 1]} : vector<32x290xbf16> to vector<32x256xbf16>
    %75 = vector.extract_strided_slice %69 {offsets = [0, 18], sizes = [32, 256], strides = [1, 1]} : vector<32x290xbf16> to vector<32x256xbf16>
    %76 = vector.extract_strided_slice %68 {offsets = [0, 32], sizes = [32, 256], strides = [1, 1]} : vector<32x290xbf16> to vector<32x256xbf16>
    %77 = vector.extract_strided_slice %66 {offsets = [0, 33], sizes = [32, 256], strides = [1, 1]} : vector<32x290xbf16> to vector<32x256xbf16>
    %78 = vector.extract_strided_slice %69 {offsets = [0, 34], sizes = [32, 256], strides = [1, 1]} : vector<32x290xbf16> to vector<32x256xbf16>
    %79 = tpu.concatenate %70, %71, %72, %73, %74, %75, %76, %77, %78 in 0 : vector<32x256xbf16>, vector<32x256xbf16>, vector<32x256xbf16>, vector<32x256xbf16>, vector<32x256xbf16>, vector<32x256xbf16>, vector<32x256xbf16>, vector<32x256xbf16>, vector<32x256xbf16> -> vector<288x256xbf16>
    %cst_26 = arith.constant dense<0.000000e+00> : vector<32x256xf32>
    %80 = tpu.matmul %38, %79, %cst_26 {dimension_numbers = #tpu.dot_dimension_numbers<[1], [0], [0], [1], [0, 0, 1, 1], [], []>} : vector<32x288xbf16>, vector<288x256xbf16>, vector<32x256xf32> -> vector<32x256xf32>
    %81 = vector.broadcast %40 : vector<32x1xf32> to vector<32x256xf32>
    %82 = arith.addf %80, %81 : vector<32x256xf32>
    %cst_27 = arith.constant 0.000000e+00 : f32
    %83 = vector.broadcast %cst_27 : f32 to vector<32x256xf32>
    %84 = arith.maximumf %82, %83 : vector<32x256xf32>
    %85 = arith.addf %84, %42 : vector<32x256xf32>
    %c0_28 = arith.constant 0 : index
    %c0_29 = arith.constant 0 : index
    %c0_30 = arith.constant 0 : index
    %86 = vector.load %arg6[%c0_28, %c0_29, %c0_30] : memref<1x32x256xf32, #tpu.memory_space<vmem>>, vector<1x32x256xf32>
    %87 = vector.shape_cast %86 : vector<1x32x256xf32> to vector<32x256xf32>
    %88 = vector.shape_cast %85 : vector<32x256xf32> to vector<1x32x256xf32>
    tpu.vector_store %arg6[%c0_28, %c0_29, %c0_30], %88 {strides = array<i32>} : memref<1x32x256xf32, #tpu.memory_space<vmem>>, vector<1x32x256xf32>,
    return
  }
  func.func @transform_0(%arg0: i32) -> (i32, i32, i32) {
    %c0_i32 = arith.constant 0 : i32
    %c0_i32_0 = arith.constant 0 : i32
    %c0_i32_1 = arith.constant 0 : i32
    return %arg0, %c0_i32, %c0_i32_0 : i32, i32, i32
  }
  func.func @transform_1(%arg0: i32) -> (i32, i32) {
    %c0_i32 = arith.constant 0 : i32
    %c0_i32_0 = arith.constant 0 : i32
    %c0_i32_1 = arith.constant 0 : i32
    return %c0_i32, %c0_i32_0 : i32, i32
  }
  func.func @transform_2(%arg0: i32) -> (i32, i32) {
    %c0_i32 = arith.constant 0 : i32
    %c0_i32_0 = arith.constant 0 : i32
    %c0_i32_1 = arith.constant 0 : i32
    return %c0_i32, %c0_i32_0 : i32, i32
  }
  func.func @transform_3(%arg0: i32) -> (i32, i32) {
    %c0_i32 = arith.constant 0 : i32
    %c0_i32_0 = arith.constant 0 : i32
    %c0_i32_1 = arith.constant 0 : i32
    return %c0_i32, %c0_i32_0 : i32, i32
  }
  func.func @transform_4(%arg0: i32) -> (i32, i32) {
    %c0_i32 = arith.constant 0 : i32
    %c0_i32_0 = arith.constant 0 : i32
    %c0_i32_1 = arith.constant 0 : i32
    return %c0_i32, %c0_i32_0 : i32, i32
  }
  func.func @transform_5(%arg0: i32) -> (i32, i32, i32) {
    %c0_i32 = arith.constant 0 : i32
    %c0_i32_0 = arith.constant 0 : i32
    %c0_i32_1 = arith.constant 0 : i32
    return %arg0, %c0_i32, %c0_i32_0 : i32, i32, i32
  }
}

</mosaic_0001>

<llo_original>
// kernel: tpu_custom_call.1
$region0: #{tpu_custom_call.1}
  #allocation0 [shape = 'u32[]', space=smem, size = 0x4, offset = 0x4, fixed_abs, tag = 'smem constant byte address 0x4 - core index']
  #allocation1 [shape = 'u32[144,128]{1,0:T(1,128)}', space=vmem, size = 0x12000, scoped, tag = 'internal scratch']
  %s0 = inlined_call_operand.hbm [shape: f32[2,32,256], index: 0, kind: input, shape index: {}]
  %s1 = inlined_call_operand.vmem [shape: bf16[32,288], index: 1, kind: input, shape index: {}]
  %s2 = inlined_call_operand.vmem [shape: f32[32,1], index: 2, kind: input, shape index: {}]
  %s3 = inlined_call_operand.hbm [shape: bf16[32,288], index: 3, kind: input, shape index: {}]
  %s4 = inlined_call_operand.vmem [shape: f32[32,1], index: 4, kind: input, shape index: {}]
  %s5 = inlined_call_operand.hbm [shape: f32[2,32,256], index: 5, kind: output, shape index: {}]
  %s6 = sld [smem:[#allocation0]]
  $region61: #{tpu_custom_call.1} parent=0
    _
  %s8 = ssub.s32 1, %s6
  %s9 = scalar_select 0, %s8, %s6
  $region1: #{tpu_custom_call.1} parent=0
    #allocation2 [shape = 'u8[65536]{0}', space=vmem, size = 0x10000, scoped, tag = 'input window, operand 0']
    #allocation3 [shape = 's32[2]{0}', space=sflag, size = 0x8, scoped, tag = 'scoped memory for tpu_custom_call.1']
    #allocation4 [shape = 's32[2]{0}', space=sflag, size = 0x8, scoped, tag = 'scoped memory for tpu_custom_call.1']
    #allocation5 [shape = 'u8[24576]{0}', space=vmem, size = 0x6000, scoped, tag = 'input window, operand 3, single buffered']
    #allocation6 [shape = 's32[1]{0}', space=sflag, size = 0x4, scoped, tag = 'scoped memory for tpu_custom_call.1']
    #allocation7 [shape = 'u8[65536]{0}', space=vmem, size = 0x10000, scoped, tag = 'output window, operand 0']
    %10 = vsyncpa [#allocation3], 0
    %s11 = scalar_lea.sflag [#allocation3], 1
    %12 = vsyncpa %s11, 0
    %13 = vsyncpa [#allocation6], 0
    %14 = vsyncpa [#allocation4], 0
    %s15 = scalar_lea.sflag [#allocation4], 1
    %16 = vsyncpa %s15, 0
    loop: start=0, step=1, limit=4
    $region2: #{tpu_custom_call.1} parent=1 // loop_pre_header
      _
    $region3: #{tpu_custom_call.1} parent=1 // loop_header
      %s18 = sphi 0, %s22
      %p19 = scmp.ge.s32.totalorder %s18, 4
      %s28 = sphi 0, %s30
      %s31 = sphi 0, %s28
      %s32 = sphi 0, %s31
      %s48 = sphi 0, %s32
      %s52 = sphi 0, %s52
      %s54 = sphi 0, %s52
      %s55 = sphi 0, %s54
      %s69 = sphi 0, %s55
      %s73 = sphi 0, %s73
      %s75 = sphi 0, %s73
      %s76 = sphi 0, %s75
      %s90 = sphi 0, %s76
      %s94 = sphi 0, %s94
      %s96 = sphi 0, %s94
      %s97 = sphi 0, %s96
      %s111 = sphi 0, %s97
      %s115 = sphi 0, %s115
      %s117 = sphi 0, %s115
      %s118 = sphi 0, %s117
      %s132 = sphi 0, %s118
      %s138 = sphi 0, %s140
      %s141 = sphi 0, %s138
      %s142 = sphi 0, %s141
      %s158 = sphi 0, %s142
    $region4: #{tpu_custom_call.1} parent=1 // loop_header_branch
      %21 = sbr.rel (%p19) target = $region8
    $region5: #{tpu_custom_call.1} parent=1 // loop_body
      %s23 = ssub.s32 %s18, 1
      %s24 = ssub.s32 %s18, 2
      %s25 = sadd.s32 %s18, 1
      %s26 = ssub.s32 %s18, %s25
      %p27 = scmp.eq.s32.totalorder %s26, 0
      %s29 = sadd.s32 %s28, 1
      %s30 = scalar_select %p27, %s28, %s29
      %p33 = pneg %p27
      %p34 = scmp.eq.s32.totalorder %s18, 1
      %p35 = por %p33, %p34
      %p36 = scmp.ne.s32.totalorder %s28, %s31
      %p37 = scmp.eq.s32.totalorder %s18, 0
      %p38 = por %p36, %p37
      %p39 = scmp.ne.s32.totalorder %s28, %s31
      %p40 = scmp.eq.s32.totalorder %s23, 1
      %p41 = por %p39, %p40
      %p42 = scmp.ne.s32.totalorder %s31, %s32
      %p43 = scmp.eq.s32.totalorder %s23, 0
      %p44 = por %p42, %p43
      %p45 = scmp.ne.s32.totalorder %s31, %s32
      %p46 = scmp.eq.s32.totalorder %s24, 1
      %p47 = por %p45, %p46
      %p49 = scmp.ne.s32.totalorder %s32, %s48
      %p50 = scmp.eq.s32.totalorder %s24, 0
      %p51 = por %p49, %p50
      %s53 = sadd.s32 %s52, 1
      %p56 = scmp.eq.s32.totalorder %s18, 1
      %p57 = scmp.ne.s32.totalorder %s52, %s54
      %p58 = scmp.eq.s32.totalorder %s18, 0
      %p59 = por %p57, %p58
      %p60 = scmp.ne.s32.totalorder %s52, %s54
      %p61 = scmp.eq.s32.totalorder %s23, 1
      %p62 = por %p60, %p61
      %p63 = scmp.ne.s32.totalorder %s54, %s55
      %p64 = scmp.eq.s32.totalorder %s23, 0
      %p65 = por %p63, %p64
      %p66 = scmp.ne.s32.totalorder %s54, %s55
      %p67 = scmp.eq.s32.totalorder %s24, 1
      %p68 = por %p66, %p67
      %p70 = scmp.ne.s32.totalorder %s55, %s69
      %p71 = scmp.eq.s32.totalorder %s24, 0
      %p72 = por %p70, %p71
      %s74 = sadd.s32 %s73, 1
      %p77 = scmp.eq.s32.totalorder %s18, 1
      %p78 = scmp.ne.s32.totalorder %s73, %s75
      %p79 = scmp.eq.s32.totalorder %s18, 0
      %p80 = por %p78, %p79
      %p81 = scmp.ne.s32.totalorder %s73, %s75
      %p82 = scmp.eq.s32.totalorder %s23, 1
      %p83 = por %p81, %p82
      %p84 = scmp.ne.s32.totalorder %s75, %s76
      %p85 = scmp.eq.s32.totalorder %s23, 0
      %p86 = por %p84, %p85
      %p87 = scmp.ne.s32.totalorder %s75, %s76
      %p88 = scmp.eq.s32.totalorder %s24, 1
      %p89 = por %p87, %p88
      %p91 = scmp.ne.s32.totalorder %s76, %s90
      %p92 = scmp.eq.s32.totalorder %s24, 0
      %p93 = por %p91, %p92
      %s95 = sadd.s32 %s94, 1
      %p98 = scmp.eq.s32.totalorder %s18, 1
      %p99 = scmp.ne.s32.totalorder %s94, %s96
      %p100 = scmp.eq.s32.totalorder %s18, 0
      %p101 = por %p99, %p100
      %p102 = scmp.ne.s32.totalorder %s94, %s96
      %p103 = scmp.eq.s32.totalorder %s23, 1
      %p104 = por %p102, %p103
      %p105 = scmp.ne.s32.totalorder %s96, %s97
      %p106 = scmp.eq.s32.totalorder %s23, 0
      %p107 = por %p105, %p106
      %p108 = scmp.ne.s32.totalorder %s96, %s97
      %p109 = scmp.eq.s32.totalorder %s24, 1
      %p110 = por %p108, %p109
      %p112 = scmp.ne.s32.totalorder %s97, %s111
      %p113 = scmp.eq.s32.totalorder %s24, 0
      %p114 = por %p112, %p113
      %s116 = sadd.s32 %s115, 1
      %p119 = scmp.eq.s32.totalorder %s18, 1
      %p120 = scmp.ne.s32.totalorder %s115, %s117
      %p121 = scmp.eq.s32.totalorder %s18, 0
      %p122 = por %p120, %p121
      %p123 = scmp.ne.s32.totalorder %s115, %s117
      %p124 = scmp.eq.s32.totalorder %s23, 1
      %p125 = por %p123, %p124
      %p126 = scmp.ne.s32.totalorder %s117, %s118
      %p127 = scmp.eq.s32.totalorder %s23, 0
      %p128 = por %p126, %p127
      %p129 = scmp.ne.s32.totalorder %s117, %s118
      %p130 = scmp.eq.s32.totalorder %s24, 1
      %p131 = por %p129, %p130
      %p133 = scmp.ne.s32.totalorder %s118, %s132
      %p134 = scmp.eq.s32.totalorder %s24, 0
      %p135 = por %p133, %p134
      %s136 = ssub.s32 %s18, %s25
      %p137 = scmp.eq.s32.totalorder %s136, 0
      %s139 = sadd.s32 %s138, 1
      %s140 = scalar_select %p137, %s138, %s139
      %p143 = pneg %p137
      %p144 = scmp.eq.s32.totalorder %s18, 1
      %p145 = por %p143, %p144
      %p146 = scmp.ne.s32.totalorder %s138, %s141
      %p147 = scmp.eq.s32.totalorder %s18, 0
      %p148 = por %p146, %p147
      %p149 = scmp.ne.s32.totalorder %s138, %s141
      %p150 = scmp.eq.s32.totalorder %s23, 1
      %p151 = por %p149, %p150
      %p152 = scmp.ne.s32.totalorder %s141, %s142
      %p153 = scmp.eq.s32.totalorder %s23, 0
      %p154 = por %p152, %p153
      %p155 = scmp.ne.s32.totalorder %s141, %s142
      %p156 = scmp.eq.s32.totalorder %s24, 1
      %p157 = por %p155, %p156
      %p159 = scmp.ne.s32.totalorder %s142, %s158
      %p160 = scmp.eq.s32.totalorder %s24, 0
      %p161 = por %p159, %p160
      %p162 = scmp.le.s32.totalorder 1, %s18
      %p163 = scmp.lt.s32.totalorder %s18, 3
      %p164 = pnand %p162, %p163
      %p165 = pneg %p164
      // Predicated region
      $region9: #{tpu_custom_call.1} parent=5 // pred_check
        _
      $region10: #{tpu_custom_call.1} parent=5 // pred_check_branch
        %167 = sbr.rel (%p164) target = $region12
      $region11: #{tpu_custom_call.1} parent=5 // pred_region
        %s168 = ssub.s32 %s18, 1
        // Predicated region
        $region13: #{tpu_custom_call.1} parent=11 // pred_check
          %p169 = pneg %p65
        $region14: #{tpu_custom_call.1} parent=11 // pred_check_branch
          %171 = sbr.rel (%p169) target = $region16
        $region15: #{tpu_custom_call.1} parent=11 // pred_region
          _
        $region16: #{tpu_custom_call.1} parent=11 // pred_fallthru
          _
        // Predicated region
        $region17: #{tpu_custom_call.1} parent=11 // pred_check
          %p172 = pneg %p86
        $region18: #{tpu_custom_call.1} parent=11 // pred_check_branch
          %174 = sbr.rel (%p172) target = $region20
        $region19: #{tpu_custom_call.1} parent=11 // pred_region
          _
        $region20: #{tpu_custom_call.1} parent=11 // pred_fallthru
          _
        // Predicated region
        $region21: #{tpu_custom_call.1} parent=11 // pred_check
          %p175 = pneg %p107
        $region22: #{tpu_custom_call.1} parent=11 // pred_check_branch
          %177 = sbr.rel (%p175) target = $region24
        $region23: #{tpu_custom_call.1} parent=11 // pred_region
          %s179 = ssub.s32 768, 768
          %180 = vsyncadd [#allocation6], %s179
          %s181 = sshll.u32 [#allocation5], 4
          %s182 = int_to_ptr.vmem [resolvable:$true] %s181
          %187 = dma.hbm_to_vmem [thread:$0]  %s3, 768, %s182, [#allocation6], 192, 192, 12
        $region24: #{tpu_custom_call.1} parent=11 // pred_fallthru
          _
        // Predicated region
        $region25: #{tpu_custom_call.1} parent=11 // pred_check
          %p188 = pneg %p128
        $region26: #{tpu_custom_call.1} parent=11 // pred_check_branch
          %190 = sbr.rel (%p188) target = $region28
        $region27: #{tpu_custom_call.1} parent=11 // pred_region
          _
        $region28: #{tpu_custom_call.1} parent=11 // pred_fallthru
          _
      $region12: #{tpu_custom_call.1} parent=5 // pred_fallthru
        _
      %p191 = scmp.lt.s32.totalorder %s18, 2
      // Predicated region
      $region29: #{tpu_custom_call.1} parent=5 // pred_check
        %p192 = pneg %p191
      $region30: #{tpu_custom_call.1} parent=5 // pred_check_branch
        %194 = sbr.rel (%p192) target = $region32
      $region31: #{tpu_custom_call.1} parent=5 // pred_region
        // Predicated region
        $region33: #{tpu_custom_call.1} parent=31 // pred_check
          %p195 = pneg %p38
        $region34: #{tpu_custom_call.1} parent=31 // pred_check_branch
          %197 = sbr.rel (%p195) target = $region36
        $region35: #{tpu_custom_call.1} parent=31 // pred_region
          %s198 = sand.u32 %s28, 1
          %s199 = scalar_lea.sflag [#allocation3], %s198
          %s200 = sand.u32 %s28, 1
          %s201 = smul.addr %s200, 64
          %s202 = scalar_lea.vmem [#allocation2], %s201
          %s204 = ssub.s32 1024, 1024
          %205 = vsyncadd %s199, %s204
          %s206 = smul.addr %s18, 8
          %s207 = smul.addr %s206, 128
          %s208 = scalar_lea.hbm %s0, %s207
          %s209 = sshll.u32 %s202, 4
          %s210 = int_to_ptr.vmem [resolvable:$true] %s209
          %215 = dma.hbm_to_vmem [thread:$0]  %s208, 1024, %s210, %s199, 256, 256, 16
        $region36: #{tpu_custom_call.1} parent=31 // pred_fallthru
          _
      $region32: #{tpu_custom_call.1} parent=5 // pred_fallthru
        _
      %p216 = scmp.le.s32.totalorder 1, %s18
      %p217 = scmp.lt.s32.totalorder %s18, 3
      %p218 = pnand %p216, %p217
      %p219 = pneg %p218
      // Predicated region
      $region37: #{tpu_custom_call.1} parent=5 // pred_check
        _
      $region38: #{tpu_custom_call.1} parent=5 // pred_check_branch
        %221 = sbr.rel (%p218) target = $region40
      $region39: #{tpu_custom_call.1} parent=5 // pred_region
        %s222 = ssub.s32 %s18, 1
        %s223 = sand.u32 %s31, 1
        %s224 = scalar_lea.sflag [#allocation3], %s223
        %s225 = sand.u32 %s31, 1
        %s226 = smul.addr %s225, 64
        %s227 = scalar_lea.vmem [#allocation2], %s226
        // Predicated region
        $region41: #{tpu_custom_call.1} parent=39 // pred_check
          %p228 = pneg %p44
        $region42: #{tpu_custom_call.1} parent=39 // pred_check_branch
          %230 = sbr.rel (%p228) target = $region44
        $region43: #{tpu_custom_call.1} parent=39 // pred_region
          %231 = dma.done %s224, 1024
        $region44: #{tpu_custom_call.1} parent=39 // pred_fallthru
          _
        // Predicated region
        $region45: #{tpu_custom_call.1} parent=39 // pred_check
          %p232 = pneg %p107
        $region46: #{tpu_custom_call.1} parent=39 // pred_check_branch
          %234 = sbr.rel (%p232) target = $region48
        $region47: #{tpu_custom_call.1} parent=39 // pred_region
          %235 = dma.done [#allocation6], 768
        $region48: #{tpu_custom_call.1} parent=39 // pred_fallthru
          _
        %s236 = sand.u32 %s31, 1
        %s237 = scalar_lea.sflag [#allocation3], %s236
        %s238 = sand.u32 %s31, 1
        %s239 = smul.addr %s238, 64
        %s240 = scalar_lea.vmem [#allocation2], %s239
        %p241 = pneg %p44
        %p242 = pneg %p41
        %p243 = pneg %p65
        %p244 = pneg %p62
        %p245 = pneg %p86
        %p246 = pneg %p83
        %p247 = pneg %p107
        %p248 = pneg %p104
        %p249 = pneg %p128
        %p250 = pneg %p125
        %p251 = pneg %p154
        %p252 = pneg %p151
        %s253 = sand.u32 %s141, 1
        %s254 = scalar_lea.sflag [#allocation4], %s253
        %s255 = sand.u32 %s141, 1
        %s256 = smul.addr %s255, 64
        %s257 = scalar_lea.vmem [#allocation7], %s256
        %v261 = vlaneseq
        %v262 = vand.u32 %v261, 127
        %v263 = vadd.s32 %v262, 128
        %v264 = vadd.s32 %v262, 256
        %vm265 = vcmp.lt.s32.totalorder %v262, 0
        %v266 = vsub.s32 0, %v262
        %v267 = vsel %vm265, %v266, %v262
        %v268 = vshrl.u32 %v267, 4
        %v269 = vand.u32 %v267, 15
        %v270 = vsub.s32 0, %v269
        %v271 = vsel %vm265, %v270, %v269
        %vm272 = vcmp.lt.s32.totalorder %v263, 0
        %v273 = vsub.s32 0, %v263
        %v274 = vsel %vm272, %v273, %v263
        %v275 = vshrl.u32 %v274, 4
        %v276 = vand.u32 %v274, 15
        %v277 = vsub.s32 0, %v276
        %v278 = vsel %vm272, %v277, %v276
        %vm279 = vcmp.lt.s32.totalorder %v264, 0
        %v280 = vsub.s32 0, %v264
        %v281 = vsel %vm279, %v280, %v264
        %v282 = vshrl.u32 %v281, 4
        %v283 = vand.u32 %v281, 15
        %v284 = vsub.s32 0, %v283
        %v285 = vsel %vm279, %v284, %v283
        %vm286 = vcmp.ne.s32.totalorder %v271, 0
        %vm287 = vcmp.ne.s32.totalorder %v278, 0
        %vm288 = vcmp.ne.s32.totalorder %v285, 0
        %vm289 = vcmp.lt.s32.totalorder %v271, 0
        %vm290 = vcmp.lt.s32.totalorder %v278, 0
        %vm291 = vcmp.lt.s32.totalorder %v285, 0
        %vm292 = vmand %vm289, %vm286
        %vm293 = vmand %vm290, %vm287
        %vm294 = vmand %vm291, %vm288
        %v295 = vadd.s32 %v271, 16
        %v296 = vadd.s32 %v278, 16
        %v297 = vadd.s32 %v285, 16
        %v298 = vsel %vm292, %v295, %v271
        %v299 = vsel %vm293, %v296, %v278
        %v300 = vsel %vm294, %v297, %v285
        %vm301 = vcmp.eq.s32.totalorder %v298, 0
        %vm302 = vcmp.eq.s32.totalorder %v299, 0
        %vm303 = vcmp.eq.s32.totalorder %v300, 0
        %vm304 = vcmp.eq.s32.totalorder %v298, 1
        %vm305 = vcmp.eq.s32.totalorder %v299, 1
        %vm306 = vcmp.eq.s32.totalorder %v300, 1
        %v307 = vld [vmem:[%s1] sm:$0xff]
        %v308 = vld [vmem:[%s1 + $0x8] sm:$0xf]
        %v309 = vld [vmem:[%s1 + $0xc] sm:$0xff]
        %v310 = vld [vmem:[%s1 + $0x14] sm:$0xf]
        %v311 = vld [vmem:[%s1 + $0x18] sm:$0xff]
        %v312 = vld [vmem:[%s1 + $0x20] sm:$0xf]
        %v313 = vld [vmem:[%s1 + $0x24] sm:$0xff]
        %v314 = vld [vmem:[%s1 + $0x2c] sm:$0xf]
        %v315 = vld [vmem:[#allocation5] sm:$0xff]
        %v316 = vld [vmem:[#allocation5 + $0x8] sm:$0xf]
        %v317 = vld [vmem:[#allocation5 + $0xc] sm:$0xff]
        %v318 = vld [vmem:[#allocation5 + $0x14] sm:$0xf]
        %v319 = vld [vmem:[#allocation5 + $0x18] sm:$0xff]
        %v320 = vld [vmem:[#allocation5 + $0x20] sm:$0xf]
        %v321 = vld [vmem:[#allocation5 + $0x24] sm:$0xff]
        %v322 = vld [vmem:[#allocation5 + $0x2c] sm:$0xf]
        %v323 = vld [vmem:[%s2] sm:$0xff]
        %v324 = vld [vmem:[%s2 + $0x8] sm:$0xff]
        %v325 = vld [vmem:[%s2 + $0x10] sm:$0xff]
        %v326 = vld [vmem:[%s2 + $0x18] sm:$0xff]
        %v327 = vld [vmem:[%s4] sm:$0xff]
        %v328 = vld [vmem:[%s4 + $0x8] sm:$0xff]
        %v329 = vld [vmem:[%s4 + $0x10] sm:$0xff]
        %v330 = vld [vmem:[%s4 + $0x18] sm:$0xff]
        %v331 = vld [vmem:[%s227] sm:$0xff]
        %v332 = vld [vmem:[%s227 + $0x8] sm:$0xff]
        %v333 = vld [vmem:[%s227 + $0x10] sm:$0xff]
        %v334 = vld [vmem:[%s227 + $0x18] sm:$0xff]
        %v335 = vld [vmem:[%s227 + $0x20] sm:$0xff]
        %v336 = vld [vmem:[%s227 + $0x28] sm:$0xff]
        %v337 = vld [vmem:[%s227 + $0x30] sm:$0xff]
        %v338 = vld [vmem:[%s227 + $0x38] sm:$0xff]
        %v339 = vpack.c.bf16 %v333, %v331
        %v340 = vpack.c.bf16 %v334, %v332
        %v341 = vpack.c.bf16 %v337, %v335
        %v342 = vpack.c.bf16 %v338, %v336
        %347 = vrot.lane.b32.xlu0 %v339, 17
        %v348 = vpop.permute.xlu0 %347
        %349 = vrot.lane.b32.xlu0 %v340, 17
        %v350 = vpop.permute.xlu0 %349
        %351 = vrot.lane.b32.xlu0 %v341, 17
        %v352 = vpop.permute.xlu0 %351
        %353 = vrot.lane.b32.xlu0 %v342, 17
        %v354 = vpop.permute.xlu0 %353
        %vm355 = vcmask 138240
        %v356 = vsel %vm355, %v348, %v350
        %v357 = vsel %vm355, %v352, %v354
        %vm360 = vcmask 138240
        %v363 = vsel %vm360, 0, %v348
        %v366 = vsel %vm360, 0, %v352
        %v369 = vsel %vm360, %v350, 0
        %v372 = vsel %vm360, %v354, 0
        %vm374 = vmpackc.low %vm302, %vm301
        %vm375 = vmpackc.low %vm303, %vm303
        %v376 = vsel %vm374, 65537, 0
        %v377 = vsel %vm375, 65537, 0
        %v378 = vlaneseq
        %v379 = vshrl.u32 %v378, 7
        %v380 = vsub.s32 0, %v379
        %v381 = vrot.slane %v376, %v380
        %v382 = vlaneseq
        %v383 = vshrl.u32 %v382, 7
        %v384 = vsub.s32 4, %v383
        %v385 = vrot.slane %v376, %v384
        %v386 = vlaneseq
        %v387 = vshrl.u32 %v386, 7
        %v388 = vsub.s32 0, %v387
        %v389 = vrot.slane %v377, %v388
        %vm390 = vcmp.ne.s16.totalorder %v381, 0
        %vm391 = vcmp.ne.s16.totalorder %v385, 0
        %vm392 = vcmp.ne.s16.totalorder %v389, 0
        %v393 = vsel %vm390, 0, %v363
        %v394 = vsel %vm391, 0, %v356
        %v395 = vsel %vm392, 0, %v369
        %v396 = vsel %vm390, 0, %v366
        %v397 = vsel %vm391, 0, %v357
        %v398 = vsel %vm392, 0, %v372
        %vm399 = vmpackc.low %vm305, %vm304
        %vm400 = vmpackc.low %vm306, %vm306
        %v401 = vsel %vm399, 65537, 0
        %v402 = vsel %vm400, 65537, 0
        %v403 = vlaneseq
        %v404 = vshrl.u32 %v403, 7
        %v405 = vsub.s32 0, %v404
        %v406 = vrot.slane %v401, %v405
        %v407 = vlaneseq
        %v408 = vshrl.u32 %v407, 7
        %v409 = vsub.s32 4, %v408
        %v410 = vrot.slane %v401, %v409
        %v411 = vlaneseq
        %v412 = vshrl.u32 %v411, 7
        %v413 = vsub.s32 0, %v412
        %v414 = vrot.slane %v402, %v413
        %vm415 = vcmp.ne.s16.totalorder %v406, 0
        %vm416 = vcmp.ne.s16.totalorder %v410, 0
        %vm417 = vcmp.ne.s16.totalorder %v414, 0
        %v418 = vsel %vm415, 0, %v363
        %v419 = vsel %vm416, 0, %v356
        %v420 = vsel %vm417, 0, %v369
        %v421 = vsel %vm415, 0, %v366
        %v422 = vsel %vm416, 0, %v357
        %v423 = vsel %vm417, 0, %v372
        %428 = vrot.lane.b32.xlu0 %v363, 127
        %v429 = vpop.permute.xlu0 %428
        %430 = vrot.lane.b32.xlu0 %v356, 127
        %v431 = vpop.permute.xlu0 %430
        %432 = vrot.lane.b32.xlu0 %v369, 127
        %v433 = vpop.permute.xlu0 %432
        %434 = vrot.lane.b32.xlu0 %v366, 127
        %v435 = vpop.permute.xlu0 %434
        %436 = vrot.lane.b32.xlu0 %v357, 127
        %v437 = vpop.permute.xlu0 %436
        %438 = vrot.lane.b32.xlu0 %v372, 127
        %v439 = vpop.permute.xlu0 %438
        %vm440 = vcmask 1039360
        %v441 = vsel %vm440, %v429, %v431
        %v442 = vsel %vm440, %v431, %v433
        %v443 = vsel %vm440, %v435, %v437
        %v444 = vsel %vm440, %v437, %v439
        %455 = vrot.lane.b32.xlu0 %v418, 126
        %v456 = vpop.permute.xlu0 %455
        %457 = vrot.lane.b32.xlu0 %v419, 126
        %v458 = vpop.permute.xlu0 %457
        %459 = vrot.lane.b32.xlu0 %v420, 126
        %v460 = vpop.permute.xlu0 %459
        %461 = vrot.lane.b32.xlu0 %v421, 126
        %v462 = vpop.permute.xlu0 %461
        %463 = vrot.lane.b32.xlu0 %v422, 126
        %v464 = vpop.permute.xlu0 %463
        %465 = vrot.lane.b32.xlu0 %v423, 126
        %v466 = vpop.permute.xlu0 %465
        %vm467 = vcmask 1031168
        %v468 = vsel %vm467, %v456, %v458
        %v469 = vsel %vm467, %v458, %v460
        %v470 = vsel %vm467, %v462, %v464
        %v471 = vsel %vm467, %v464, %v466
        %482 = vrot.lane.b32.xlu0 %v393, 112
        %v483 = vpop.permute.xlu0 %482
        %484 = vrot.lane.b32.xlu0 %v394, 112
        %v485 = vpop.permute.xlu0 %484
        %486 = vrot.lane.b32.xlu0 %v395, 112
        %v487 = vpop.permute.xlu0 %486
        %488 = vrot.lane.b32.xlu0 %v396, 112
        %v489 = vpop.permute.xlu0 %488
        %490 = vrot.lane.b32.xlu0 %v397, 112
        %v491 = vpop.permute.xlu0 %490
        %492 = vrot.lane.b32.xlu0 %v398, 112
        %v493 = vpop.permute.xlu0 %492
        %vm494 = vcmask 916480
        %v495 = vsel %vm494, %v483, %v485
        %v496 = vsel %vm494, %v485, %v487
        %v497 = vsel %vm494, %v489, %v491
        %v498 = vsel %vm494, %v491, %v493
        %503 = vrot.lane.b32.xlu0 %v363, 111
        %v504 = vpop.permute.xlu0 %503
        %505 = vrot.lane.b32.xlu0 %v356, 111
        %v506 = vpop.permute.xlu0 %505
        %507 = vrot.lane.b32.xlu0 %v369, 111
        %v508 = vpop.permute.xlu0 %507
        %509 = vrot.lane.b32.xlu0 %v366, 111
        %v510 = vpop.permute.xlu0 %509
        %511 = vrot.lane.b32.xlu0 %v357, 111
        %v512 = vpop.permute.xlu0 %511
        %513 = vrot.lane.b32.xlu0 %v372, 111
        %v514 = vpop.permute.xlu0 %513
        %vm515 = vcmask 908288
        %v516 = vsel %vm515, %v504, %v506
        %v517 = vsel %vm515, %v506, %v508
        %v518 = vsel %vm515, %v510, %v512
        %v519 = vsel %vm515, %v512, %v514
        %524 = vrot.lane.b32.xlu0 %v418, 110
        %v525 = vpop.permute.xlu0 %524
        %526 = vrot.lane.b32.xlu0 %v419, 110
        %v527 = vpop.permute.xlu0 %526
        %528 = vrot.lane.b32.xlu0 %v420, 110
        %v529 = vpop.permute.xlu0 %528
        %530 = vrot.lane.b32.xlu0 %v421, 110
        %v531 = vpop.permute.xlu0 %530
        %532 = vrot.lane.b32.xlu0 %v422, 110
        %v533 = vpop.permute.xlu0 %532
        %534 = vrot.lane.b32.xlu0 %v423, 110
        %v535 = vpop.permute.xlu0 %534
        %vm536 = vcmask 900096
        %v537 = vsel %vm536, %v525, %v527
        %v538 = vsel %vm536, %v527, %v529
        %v539 = vsel %vm536, %v531, %v533
        %v540 = vsel %vm536, %v533, %v535
        %545 = vrot.lane.b32.xlu0 %v393, 96
        %v546 = vpop.permute.xlu0 %545
        %547 = vrot.lane.b32.xlu0 %v394, 96
        %v548 = vpop.permute.xlu0 %547
        %549 = vrot.lane.b32.xlu0 %v395, 96
        %v550 = vpop.permute.xlu0 %549
        %551 = vrot.lane.b32.xlu0 %v396, 96
        %v552 = vpop.permute.xlu0 %551
        %553 = vrot.lane.b32.xlu0 %v397, 96
        %v554 = vpop.permute.xlu0 %553
        %555 = vrot.lane.b32.xlu0 %v398, 96
        %v556 = vpop.permute.xlu0 %555
        %vm557 = vcmask 785408
        %v558 = vsel %vm557, %v546, %v548
        %v559 = vsel %vm557, %v548, %v550
        %v560 = vsel %vm557, %v552, %v554
        %v561 = vsel %vm557, %v554, %v556
        %566 = vrot.lane.b32.xlu0 %v363, 95
        %v567 = vpop.permute.xlu0 %566
        %568 = vrot.lane.b32.xlu0 %v356, 95
        %v569 = vpop.permute.xlu0 %568
        %570 = vrot.lane.b32.xlu0 %v369, 95
        %v571 = vpop.permute.xlu0 %570
        %572 = vrot.lane.b32.xlu0 %v366, 95
        %v573 = vpop.permute.xlu0 %572
        %574 = vrot.lane.b32.xlu0 %v357, 95
        %v575 = vpop.permute.xlu0 %574
        %576 = vrot.lane.b32.xlu0 %v372, 95
        %v577 = vpop.permute.xlu0 %576
        %vm578 = vcmask 777216
        %v579 = vsel %vm578, %v567, %v569
        %v580 = vsel %vm578, %v569, %v571
        %v581 = vsel %vm578, %v573, %v575
        %v582 = vsel %vm578, %v575, %v577
        %587 = vrot.lane.b32.xlu0 %v418, 94
        %v588 = vpop.permute.xlu0 %587
        %589 = vrot.lane.b32.xlu0 %v419, 94
        %v590 = vpop.permute.xlu0 %589
        %591 = vrot.lane.b32.xlu0 %v420, 94
        %v592 = vpop.permute.xlu0 %591
        %593 = vrot.lane.b32.xlu0 %v421, 94
        %v594 = vpop.permute.xlu0 %593
        %595 = vrot.lane.b32.xlu0 %v422, 94
        %v596 = vpop.permute.xlu0 %595
        %597 = vrot.lane.b32.xlu0 %v423, 94
        %v598 = vpop.permute.xlu0 %597
        %vm599 = vcmask 769024
        %v600 = vsel %vm599, %v588, %v590
        %v601 = vsel %vm599, %v590, %v592
        %v602 = vsel %vm599, %v594, %v596
        %v603 = vsel %vm599, %v596, %v598
        %609 = vset.pattern.permute.xlu0 0
        %610 = vperm.xlu0 %609, %v323
        %v611 = vpop.permute.xlu0 %610
        %614 = vset.pattern.permute.xlu0 0
        %615 = vperm.xlu0 %614, %v324
        %v616 = vpop.permute.xlu0 %615
        %619 = vset.pattern.permute.xlu0 0
        %620 = vperm.xlu0 %619, %v325
        %v621 = vpop.permute.xlu0 %620
        %624 = vset.pattern.permute.xlu0 0
        %625 = vperm.xlu0 %624, %v326
        %v626 = vpop.permute.xlu0 %625
        %v636 = vunpack.c.l.b16 %v307
        %v637 = vunpack.c.h.b16 %v307
        %v638 = vunpack.c.l.b16 %v308
        %v639 = vunpack.c.l.b16 %v309
        %v640 = vunpack.c.h.b16 %v309
        %v641 = vunpack.c.l.b16 %v310
        %v642 = vunpack.c.l.b16 %v311
        %v643 = vunpack.c.h.b16 %v311
        %v644 = vunpack.c.l.b16 %v312
        %v645 = vunpack.c.l.b16 %v313
        %v646 = vunpack.c.h.b16 %v313
        %v647 = vunpack.c.l.b16 %v314
        %v648 = vpack.c.b16 %v639, %v636
        %v649 = vpack.c.b16 %v640, %v637
        %v650 = vpack.c.b16 %v641, %v638
        %v651 = vpack.c.b16 %v645, %v642
        %v652 = vpack.c.b16 %v646, %v643
        %v653 = vpack.c.b16 %v647, %v644
        %vm658 = vcmask 261120
        %v660 = vsel %vm658, %v650, 0
        %v663 = vsel %vm658, %v653, 0
        %665 = vmatprep.subr.bf16.mxu0 %v394
        %666 = vmatpush1.bf16.msra.mxu0 %v393
        %667 = vmatprep.subr.bf16.mxu0 %v397
        %668 = vmatpush1.bf16.msra.mxu0 %v396
        %669 = vmatprep.subr.bf16.mxu0 %v442
        %670 = vmatpush1.bf16.msra.mxu0 %v441
        %671 = vmatprep.subr.bf16.mxu0 %v444
        %672 = vmatpush1.bf16.msra.mxu0 %v443
        %673 = vmatprep.subr.bf16.mxu0 %v469
        %674 = vmatpush1.bf16.msra.mxu0 %v468
        %675 = vmatprep.subr.bf16.mxu0 %v471
        %676 = vmatpush1.bf16.msra.mxu0 %v470
        %677 = vmatprep.subr.bf16.mxu0 %v496
        %678 = vmatpush1.bf16.msra.mxu0 %v495
        %679 = vmatprep.subr.bf16.mxu0 %v498
        %680 = vmatpush1.bf16.msra.mxu0 %v497
        %681 = vmatprep.subr.bf16.mxu0 %v517
        %682 = vmatpush1.bf16.msra.mxu0 %v516
        %683 = vmatprep.subr.bf16.mxu0 %v519
        %684 = vmatpush1.bf16.msra.mxu0 %v518
        %685 = vmatprep.subr.bf16.mxu0 %v538
        %686 = vmatpush1.bf16.msra.mxu0 %v537
        %687 = vmatprep.subr.bf16.mxu0 %v540
        %688 = vmatpush1.bf16.msra.mxu0 %v539
        %689 = vmatprep.subr.bf16.mxu0 %v559
        %690 = vmatpush1.bf16.msra.mxu0 %v558
        %691 = vmatprep.subr.bf16.mxu0 %v561
        %692 = vmatpush1.bf16.msra.mxu0 %v560
        %693 = vmatprep.subr.bf16.mxu0 %v580
        %694 = vmatpush1.bf16.msra.mxu0 %v579
        %695 = vmatprep.subr.bf16.mxu0 %v582
        %696 = vmatpush1.bf16.msra.mxu0 %v581
        %697 = vmatprep.mubr.bf16.mxu0 %v649
        %698 = vmatmul.mubr.bf16.gmra.mrb[0].mxu0 %v648
        %v699 = vpop.f32.mrb[0].mxu0
        %v700 = vadd.f32 %v611, %v699
        %v701 = vpop.f32.mrb[0].mxu0
        %v702 = vadd.f32 %v611, %v701
        %v703 = vpop.f32.mrb[0].mxu0
        %v704 = vadd.f32 %v616, %v703
        %v705 = vpop.f32.mrb[0].mxu0
        %v706 = vadd.f32 %v616, %v705
        %707 = vmatprep.mubr.bf16.mxu0 %v652
        %708 = vmatmul.mubr.bf16.gmra.mrb[0].mxu0 %v651
        %v709 = vpop.f32.mrb[0].mxu0
        %v710 = vadd.f32 %v621, %v709
        %v711 = vpop.f32.mrb[0].mxu0
        %v712 = vadd.f32 %v621, %v711
        %v713 = vpop.f32.mrb[0].mxu0
        %v714 = vadd.f32 %v626, %v713
        %v715 = vpop.f32.mrb[0].mxu0
        %v716 = vadd.f32 %v626, %v715
        %717 = vdwg.mxu0
        %718 = vmatprep.subr.bf16.mxu0 %v601
        %719 = vmatpush1.bf16.msra.mxu0 %v600
        %720 = vmatprep.subr.bf16.mxu0 %v603
        %721 = vmatpush1.bf16.msra.mxu0 %v602
        %722 = vmatprep.subr.bf16.mxu0 0
        %723 = vmatpush1.bf16.msra.mxu0 0
        %724 = vmatprep.subr.bf16.mxu0 0
        %725 = vmatpush1.bf16.msra.mxu0 0
        %726 = vmatprep.subr.bf16.mxu0 0
        %727 = vmatpush1.bf16.msra.mxu0 0
        %728 = vmatprep.subr.bf16.mxu0 0
        %729 = vmatpush1.bf16.msra.mxu0 0
        %730 = vmatprep.subr.bf16.mxu0 0
        %731 = vmatpush1.bf16.msra.mxu0 0
        %732 = vmatprep.subr.bf16.mxu0 0
        %733 = vmatpush1.bf16.msra.mxu0 0
        %734 = vmatprep.subr.bf16.mxu0 0
        %735 = vmatpush1.bf16.msra.mxu0 0
        %736 = vmatprep.subr.bf16.mxu0 0
        %737 = vmatpush1.bf16.msra.mxu0 0
        %738 = vmatprep.subr.bf16.mxu0 0
        %739 = vmatpush1.bf16.msra.mxu0 0
        %740 = vmatprep.subr.bf16.mxu0 0
        %741 = vmatpush1.bf16.msra.mxu0 0
        %742 = vmatprep.subr.bf16.mxu0 0
        %743 = vmatpush1.bf16.msra.mxu0 0
        %744 = vmatprep.subr.bf16.mxu0 0
        %745 = vmatpush1.bf16.msra.mxu0 0
        %746 = vmatprep.subr.bf16.mxu0 0
        %747 = vmatpush1.bf16.msra.mxu0 0
        %748 = vmatprep.subr.bf16.mxu0 0
        %749 = vmatpush1.bf16.msra.mxu0 0
        %750 = vmatprep.mubr.bf16.mxu0 0
        %751 = vmatmul.mubr.bf16.gmra.mrb[0].mxu0 %v660
        %v752 = vpop.f32.mrb[0].mxu0
        %v753 = vadd.f32 %v700, %v752
        %v754 = vpop.f32.mrb[0].mxu0
        %v755 = vadd.f32 %v702, %v754
        %v756 = vpop.f32.mrb[0].mxu0
        %v757 = vadd.f32 %v704, %v756
        %v758 = vpop.f32.mrb[0].mxu0
        %v759 = vadd.f32 %v706, %v758
        %760 = vmatprep.mubr.bf16.mxu0 0
        %761 = vmatmul.mubr.bf16.gmra.mrb[0].mxu0 %v663
        %v762 = vpop.f32.mrb[0].mxu0
        %v763 = vadd.f32 %v710, %v762
        %v764 = vpop.f32.mrb[0].mxu0
        %v765 = vadd.f32 %v712, %v764
        %v766 = vpop.f32.mrb[0].mxu0
        %v767 = vadd.f32 %v714, %v766
        %v768 = vpop.f32.mrb[0].mxu0
        %v769 = vadd.f32 %v716, %v768
        %770 = vdwg.mxu0
        %v771 = vmax.f32 %v753, 0.0
        %v772 = vmax.f32 %v755, 0.0
        %v773 = vmax.f32 %v757, 0.0
        %v774 = vmax.f32 %v759, 0.0
        %v775 = vmax.f32 %v763, 0.0
        %v776 = vmax.f32 %v765, 0.0
        %v777 = vmax.f32 %v767, 0.0
        %v778 = vmax.f32 %v769, 0.0
        %v779 = vpack.c.bf16 %v773, %v771
        %v780 = vpack.c.bf16 %v774, %v772
        %v781 = vpack.c.bf16 %v777, %v775
        %v782 = vpack.c.bf16 %v778, %v776
        %787 = vrot.lane.b32.xlu0 %v779, 17
        %v788 = vpop.permute.xlu0 %787
        %789 = vrot.lane.b32.xlu0 %v780, 17
        %v790 = vpop.permute.xlu0 %789
        %791 = vrot.lane.b32.xlu0 %v781, 17
        %v792 = vpop.permute.xlu0 %791
        %793 = vrot.lane.b32.xlu0 %v782, 17
        %v794 = vpop.permute.xlu0 %793
        %v795 = vsel %vm355, %v788, %v790
        %v796 = vsel %vm355, %v792, %v794
        %v800 = vsel %vm360, 0, %v788
        %v803 = vsel %vm360, 0, %v792
        %v806 = vsel %vm360, %v790, 0
        %v809 = vsel %vm360, %v794, 0
        %v811 = vsel %vm390, 0, %v800
        %v812 = vsel %vm391, 0, %v795
        %v813 = vsel %vm392, 0, %v806
        %v814 = vsel %vm390, 0, %v803
        %v815 = vsel %vm391, 0, %v796
        %v816 = vsel %vm392, 0, %v809
        %v817 = vsel %vm415, 0, %v800
        %v818 = vsel %vm416, 0, %v795
        %v819 = vsel %vm417, 0, %v806
        %v820 = vsel %vm415, 0, %v803
        %v821 = vsel %vm416, 0, %v796
        %v822 = vsel %vm417, 0, %v809
        %827 = vrot.lane.b32.xlu0 %v800, 127
        %v828 = vpop.permute.xlu0 %827
        %829 = vrot.lane.b32.xlu0 %v795, 127
        %v830 = vpop.permute.xlu0 %829
        %831 = vrot.lane.b32.xlu0 %v806, 127
        %v832 = vpop.permute.xlu0 %831
        %833 = vrot.lane.b32.xlu0 %v803, 127
        %v834 = vpop.permute.xlu0 %833
        %835 = vrot.lane.b32.xlu0 %v796, 127
        %v836 = vpop.permute.xlu0 %835
        %837 = vrot.lane.b32.xlu0 %v809, 127
        %v838 = vpop.permute.xlu0 %837
        %v839 = vsel %vm440, %v828, %v830
        %v840 = vsel %vm440, %v830, %v832
        %v841 = vsel %vm440, %v834, %v836
        %v842 = vsel %vm440, %v836, %v838
        %853 = vrot.lane.b32.xlu0 %v817, 126
        %v854 = vpop.permute.xlu0 %853
        %855 = vrot.lane.b32.xlu0 %v818, 126
        %v856 = vpop.permute.xlu0 %855
        %857 = vrot.lane.b32.xlu0 %v819, 126
        %v858 = vpop.permute.xlu0 %857
        %859 = vrot.lane.b32.xlu0 %v820, 126
        %v860 = vpop.permute.xlu0 %859
        %861 = vrot.lane.b32.xlu0 %v821, 126
        %v862 = vpop.permute.xlu0 %861
        %863 = vrot.lane.b32.xlu0 %v822, 126
        %v864 = vpop.permute.xlu0 %863
        %v865 = vsel %vm467, %v854, %v856
        %v866 = vsel %vm467, %v856, %v858
        %v867 = vsel %vm467, %v860, %v862
        %v868 = vsel %vm467, %v862, %v864
        %879 = vrot.lane.b32.xlu0 %v811, 112
        %v880 = vpop.permute.xlu0 %879
        %881 = vrot.lane.b32.xlu0 %v812, 112
        %v882 = vpop.permute.xlu0 %881
        %883 = vrot.lane.b32.xlu0 %v813, 112
        %v884 = vpop.permute.xlu0 %883
        %885 = vrot.lane.b32.xlu0 %v814, 112
        %v886 = vpop.permute.xlu0 %885
        %887 = vrot.lane.b32.xlu0 %v815, 112
        %v888 = vpop.permute.xlu0 %887
        %889 = vrot.lane.b32.xlu0 %v816, 112
        %v890 = vpop.permute.xlu0 %889
        %v891 = vsel %vm494, %v880, %v882
        %v892 = vsel %vm494, %v882, %v884
        %v893 = vsel %vm494, %v886, %v888
        %v894 = vsel %vm494, %v888, %v890
        %899 = vrot.lane.b32.xlu0 %v800, 111
        %v900 = vpop.permute.xlu0 %899
        %901 = vrot.lane.b32.xlu0 %v795, 111
        %v902 = vpop.permute.xlu0 %901
        %903 = vrot.lane.b32.xlu0 %v806, 111
        %v904 = vpop.permute.xlu0 %903
        %905 = vrot.lane.b32.xlu0 %v803, 111
        %v906 = vpop.permute.xlu0 %905
        %907 = vrot.lane.b32.xlu0 %v796, 111
        %v908 = vpop.permute.xlu0 %907
        %909 = vrot.lane.b32.xlu0 %v809, 111
        %v910 = vpop.permute.xlu0 %909
        %v911 = vsel %vm515, %v900, %v902
        %v912 = vsel %vm515, %v902, %v904
        %v913 = vsel %vm515, %v906, %v908
        %v914 = vsel %vm515, %v908, %v910
        %919 = vrot.lane.b32.xlu0 %v817, 110
        %v920 = vpop.permute.xlu0 %919
        %921 = vrot.lane.b32.xlu0 %v818, 110
        %v922 = vpop.permute.xlu0 %921
        %923 = vrot.lane.b32.xlu0 %v819, 110
        %v924 = vpop.permute.xlu0 %923
        %925 = vrot.lane.b32.xlu0 %v820, 110
        %v926 = vpop.permute.xlu0 %925
        %927 = vrot.lane.b32.xlu0 %v821, 110
        %v928 = vpop.permute.xlu0 %927
        %929 = vrot.lane.b32.xlu0 %v822, 110
        %v930 = vpop.permute.xlu0 %929
        %v931 = vsel %vm536, %v920, %v922
        %v932 = vsel %vm536, %v922, %v924
        %v933 = vsel %vm536, %v926, %v928
        %v934 = vsel %vm536, %v928, %v930
        %939 = vrot.lane.b32.xlu0 %v811, 96
        %v940 = vpop.permute.xlu0 %939
        %941 = vrot.lane.b32.xlu0 %v812, 96
        %v942 = vpop.permute.xlu0 %941
        %943 = vrot.lane.b32.xlu0 %v813, 96
        %v944 = vpop.permute.xlu0 %943
        %945 = vrot.lane.b32.xlu0 %v814, 96
        %v946 = vpop.permute.xlu0 %945
        %947 = vrot.lane.b32.xlu0 %v815, 96
        %v948 = vpop.permute.xlu0 %947
        %949 = vrot.lane.b32.xlu0 %v816, 96
        %v950 = vpop.permute.xlu0 %949
        %v951 = vsel %vm557, %v940, %v942
        %v952 = vsel %vm557, %v942, %v944
        %v953 = vsel %vm557, %v946, %v948
        %v954 = vsel %vm557, %v948, %v950
        %959 = vrot.lane.b32.xlu0 %v800, 95
        %v960 = vpop.permute.xlu0 %959
        %961 = vrot.lane.b32.xlu0 %v795, 95
        %v962 = vpop.permute.xlu0 %961
        %963 = vrot.lane.b32.xlu0 %v806, 95
        %v964 = vpop.permute.xlu0 %963
        %965 = vrot.lane.b32.xlu0 %v803, 95
        %v966 = vpop.permute.xlu0 %965
        %967 = vrot.lane.b32.xlu0 %v796, 95
        %v968 = vpop.permute.xlu0 %967
        %969 = vrot.lane.b32.xlu0 %v809, 95
        %v970 = vpop.permute.xlu0 %969
        %v971 = vsel %vm578, %v960, %v962
        %v972 = vsel %vm578, %v962, %v964
        %v973 = vsel %vm578, %v966, %v968
        %v974 = vsel %vm578, %v968, %v970
        %979 = vrot.lane.b32.xlu0 %v817, 94
        %v980 = vpop.permute.xlu0 %979
        %981 = vrot.lane.b32.xlu0 %v818, 94
        %v982 = vpop.permute.xlu0 %981
        %983 = vrot.lane.b32.xlu0 %v819, 94
        %v984 = vpop.permute.xlu0 %983
        %985 = vrot.lane.b32.xlu0 %v820, 94
        %v986 = vpop.permute.xlu0 %985
        %987 = vrot.lane.b32.xlu0 %v821, 94
        %v988 = vpop.permute.xlu0 %987
        %989 = vrot.lane.b32.xlu0 %v822, 94
        %v990 = vpop.permute.xlu0 %989
        %v991 = vsel %vm599, %v980, %v982
        %v992 = vsel %vm599, %v982, %v984
        %v993 = vsel %vm599, %v986, %v988
        %v994 = vsel %vm599, %v988, %v990
        %1000 = vset.pattern.permute.xlu0 0
        %1001 = vperm.xlu0 %1000, %v327
        %v1002 = vpop.permute.xlu0 %1001
        %1005 = vset.pattern.permute.xlu0 0
        %1006 = vperm.xlu0 %1005, %v328
        %v1007 = vpop.permute.xlu0 %1006
        %1010 = vset.pattern.permute.xlu0 0
        %1011 = vperm.xlu0 %1010, %v329
        %v1012 = vpop.permute.xlu0 %1011
        %1015 = vset.pattern.permute.xlu0 0
        %1016 = vperm.xlu0 %1015, %v330
        %v1017 = vpop.permute.xlu0 %1016
        %v1027 = vunpack.c.l.b16 %v315
        %v1028 = vunpack.c.h.b16 %v315
        %v1029 = vunpack.c.l.b16 %v316
        %v1030 = vunpack.c.l.b16 %v317
        %v1031 = vunpack.c.h.b16 %v317
        %v1032 = vunpack.c.l.b16 %v318
        %v1033 = vunpack.c.l.b16 %v319
        %v1034 = vunpack.c.h.b16 %v319
        %v1035 = vunpack.c.l.b16 %v320
        %v1036 = vunpack.c.l.b16 %v321
        %v1037 = vunpack.c.h.b16 %v321
        %v1038 = vunpack.c.l.b16 %v322
        %v1039 = vpack.c.b16 %v1030, %v1027
        %v1040 = vpack.c.b16 %v1031, %v1028
        %v1041 = vpack.c.b16 %v1032, %v1029
        %v1042 = vpack.c.b16 %v1036, %v1033
        %v1043 = vpack.c.b16 %v1037, %v1034
        %v1044 = vpack.c.b16 %v1038, %v1035
        %v1050 = vsel %vm658, %v1041, 0
        %v1053 = vsel %vm658, %v1044, 0
        %1055 = vmatprep.subr.bf16.mxu0 %v812
        %1056 = vmatpush1.bf16.msra.mxu0 %v811
        %1057 = vmatprep.subr.bf16.mxu0 %v815
        %1058 = vmatpush1.bf16.msra.mxu0 %v814
        %1059 = vmatprep.subr.bf16.mxu0 %v840
        %1060 = vmatpush1.bf16.msra.mxu0 %v839
        %1061 = vmatprep.subr.bf16.mxu0 %v842
        %1062 = vmatpush1.bf16.msra.mxu0 %v841
        %1063 = vmatprep.subr.bf16.mxu0 %v866
        %1064 = vmatpush1.bf16.msra.mxu0 %v865
        %1065 = vmatprep.subr.bf16.mxu0 %v868
        %1066 = vmatpush1.bf16.msra.mxu0 %v867
        %1067 = vmatprep.subr.bf16.mxu0 %v892
        %1068 = vmatpush1.bf16.msra.mxu0 %v891
        %1069 = vmatprep.subr.bf16.mxu0 %v894
        %1070 = vmatpush1.bf16.msra.mxu0 %v893
        %1071 = vmatprep.subr.bf16.mxu0 %v912
        %1072 = vmatpush1.bf16.msra.mxu0 %v911
        %1073 = vmatprep.subr.bf16.mxu0 %v914
        %1074 = vmatpush1.bf16.msra.mxu0 %v913
        %1075 = vmatprep.subr.bf16.mxu0 %v932
        %1076 = vmatpush1.bf16.msra.mxu0 %v931
        %1077 = vmatprep.subr.bf16.mxu0 %v934
        %1078 = vmatpush1.bf16.msra.mxu0 %v933
        %1079 = vmatprep.subr.bf16.mxu0 %v952
        %1080 = vmatpush1.bf16.msra.mxu0 %v951
        %1081 = vmatprep.subr.bf16.mxu0 %v954
        %1082 = vmatpush1.bf16.msra.mxu0 %v953
        %1083 = vmatprep.subr.bf16.mxu0 %v972
        %1084 = vmatpush1.bf16.msra.mxu0 %v971
        %1085 = vmatprep.subr.bf16.mxu0 %v974
        %1086 = vmatpush1.bf16.msra.mxu0 %v973
        %1087 = vmatprep.mubr.bf16.mxu0 %v1040
        %1088 = vmatmul.mubr.bf16.gmra.mrb[0].mxu0 %v1039
        %v1089 = vpop.f32.mrb[0].mxu0
        %v1090 = vadd.f32 %v1002, %v1089
        %v1091 = vpop.f32.mrb[0].mxu0
        %v1092 = vadd.f32 %v1002, %v1091
        %v1093 = vpop.f32.mrb[0].mxu0
        %v1094 = vadd.f32 %v1007, %v1093
        %v1095 = vpop.f32.mrb[0].mxu0
        %v1096 = vadd.f32 %v1007, %v1095
        %1097 = vmatprep.mubr.bf16.mxu0 %v1043
        %1098 = vmatmul.mubr.bf16.gmra.mrb[0].mxu0 %v1042
        %v1099 = vpop.f32.mrb[0].mxu0
        %v1100 = vadd.f32 %v1012, %v1099
        %v1101 = vpop.f32.mrb[0].mxu0
        %v1102 = vadd.f32 %v1012, %v1101
        %v1103 = vpop.f32.mrb[0].mxu0
        %v1104 = vadd.f32 %v1017, %v1103
        %v1105 = vpop.f32.mrb[0].mxu0
        %v1106 = vadd.f32 %v1017, %v1105
        %1107 = vdwg.mxu0
        %1108 = vmatprep.subr.bf16.mxu0 %v992
        %1109 = vmatpush1.bf16.msra.mxu0 %v991
        %1110 = vmatprep.subr.bf16.mxu0 %v994
        %1111 = vmatpush1.bf16.msra.mxu0 %v993
        %1112 = vmatprep.subr.bf16.mxu0 0
        %1113 = vmatpush1.bf16.msra.mxu0 0
        %1114 = vmatprep.subr.bf16.mxu0 0
        %1115 = vmatpush1.bf16.msra.mxu0 0
        %1116 = vmatprep.subr.bf16.mxu0 0
        %1117 = vmatpush1.bf16.msra.mxu0 0
        %1118 = vmatprep.subr.bf16.mxu0 0
        %1119 = vmatpush1.bf16.msra.mxu0 0
        %1120 = vmatprep.subr.bf16.mxu0 0
        %1121 = vmatpush1.bf16.msra.mxu0 0
        %1122 = vmatprep.subr.bf16.mxu0 0
        %1123 = vmatpush1.bf16.msra.mxu0 0
        %1124 = vmatprep.subr.bf16.mxu0 0
        %1125 = vmatpush1.bf16.msra.mxu0 0
        %1126 = vmatprep.subr.bf16.mxu0 0
        %1127 = vmatpush1.bf16.msra.mxu0 0
        %1128 = vmatprep.subr.bf16.mxu0 0
        %1129 = vmatpush1.bf16.msra.mxu0 0
        %1130 = vmatprep.subr.bf16.mxu0 0
        %1131 = vmatpush1.bf16.msra.mxu0 0
        %1132 = vmatprep.subr.bf16.mxu0 0
        %1133 = vmatpush1.bf16.msra.mxu0 0
        %1134 = vmatprep.subr.bf16.mxu0 0
        %1135 = vmatpush1.bf16.msra.mxu0 0
        %1136 = vmatprep.subr.bf16.mxu0 0
        %1137 = vmatpush1.bf16.msra.mxu0 0
        %1138 = vmatprep.subr.bf16.mxu0 0
        %1139 = vmatpush1.bf16.msra.mxu0 0
        %1140 = vmatprep.mubr.bf16.mxu0 0
        %1141 = vmatmul.mubr.bf16.gmra.mrb[0].mxu0 %v1050
        %v1142 = vpop.f32.mrb[0].mxu0
        %v1143 = vadd.f32 %v1090, %v1142
        %v1144 = vpop.f32.mrb[0].mxu0
        %v1145 = vadd.f32 %v1092, %v1144
        %v1146 = vpop.f32.mrb[0].mxu0
        %v1147 = vadd.f32 %v1094, %v1146
        %v1148 = vpop.f32.mrb[0].mxu0
        %v1149 = vadd.f32 %v1096, %v1148
        %1150 = vmatprep.mubr.bf16.mxu0 0
        %1151 = vmatmul.mubr.bf16.gmra.mrb[0].mxu0 %v1053
        %v1152 = vpop.f32.mrb[0].mxu0
        %v1153 = vadd.f32 %v1100, %v1152
        %v1154 = vpop.f32.mrb[0].mxu0
        %v1155 = vadd.f32 %v1102, %v1154
        %v1156 = vpop.f32.mrb[0].mxu0
        %v1157 = vadd.f32 %v1104, %v1156
        %v1158 = vpop.f32.mrb[0].mxu0
        %v1159 = vadd.f32 %v1106, %v1158
        %1160 = vdwg.mxu0
        %v1161 = vmax.f32 %v1143, 0.0
        %v1162 = vmax.f32 %v1145, 0.0
        %v1163 = vmax.f32 %v1147, 0.0
        %v1164 = vmax.f32 %v1149, 0.0
        %v1165 = vmax.f32 %v1153, 0.0
        %v1166 = vmax.f32 %v1155, 0.0
        %v1167 = vmax.f32 %v1157, 0.0
        %v1168 = vmax.f32 %v1159, 0.0
        %v1169 = vadd.f32 %v1161, %v331
        %v1170 = vadd.f32 %v1162, %v332
        %v1171 = vadd.f32 %v1163, %v333
        %v1172 = vadd.f32 %v1164, %v334
        %v1173 = vadd.f32 %v1165, %v335
        %v1174 = vadd.f32 %v1166, %v336
        %v1175 = vadd.f32 %v1167, %v337
        %v1176 = vadd.f32 %v1168, %v338
        %1177 = vst [vmem:[%s257] sm:$0xff] %v1169
        %1178 = vst [vmem:[%s257 + $0x8] sm:$0xff] %v1170
        %1179 = vst [vmem:[%s257 + $0x10] sm:$0xff] %v1171
        %1180 = vst [vmem:[%s257 + $0x18] sm:$0xff] %v1172
        %1181 = vst [vmem:[%s257 + $0x20] sm:$0xff] %v1173
        %1182 = vst [vmem:[%s257 + $0x28] sm:$0xff] %v1174
        %1183 = vst [vmem:[%s257 + $0x30] sm:$0xff] %v1175
        %1184 = vst [vmem:[%s257 + $0x38] sm:$0xff] %v1176
        %s1185 = sand.u32 %s141, 1
        %s1186 = scalar_lea.sflag [#allocation4], %s1185
        %s1187 = sand.u32 %s141, 1
        %s1188 = smul.addr %s1187, 64
        %s1189 = scalar_lea.vmem [#allocation7], %s1188
        // Predicated region
        $region49: #{tpu_custom_call.1} parent=39 // pred_check
          %p1190 = pneg %p151
        $region50: #{tpu_custom_call.1} parent=39 // pred_check_branch
          %1192 = sbr.rel (%p1190) target = $region52
        $region51: #{tpu_custom_call.1} parent=39 // pred_region
          %s1194 = ssub.s32 1024, 1024
          %1195 = vsyncadd %s1186, %s1194
          %s1196 = smul.addr %s23, 8
          %s1197 = smul.addr %s1196, 128
          %s1198 = scalar_lea.hbm %s5, %s1197
          %s1199 = sshll.u32 %s1189, 4
          %s1200 = int_to_ptr.vmem [resolvable:$true] %s1199
          %1205 = dma.vmem_to_hbm [thread:$0]  %s1200, 1024, %s1198, %s1186, 256, 256, 16
        $region52: #{tpu_custom_call.1} parent=39 // pred_fallthru
          _
      $region40: #{tpu_custom_call.1} parent=5 // pred_fallthru
        _
      %p1206 = scmp.le.s32.totalorder 2, %s18
      // Predicated region
      $region53: #{tpu_custom_call.1} parent=5 // pred_check
        %p1207 = pneg %p1206
      $region54: #{tpu_custom_call.1} parent=5 // pred_check_branch
        %1209 = sbr.rel (%p1207) target = $region56
      $region55: #{tpu_custom_call.1} parent=5 // pred_region
        %s1210 = ssub.s32 %s18, 2
        // Predicated region
        $region57: #{tpu_custom_call.1} parent=55 // pred_check
          %p1211 = pneg %p157
        $region58: #{tpu_custom_call.1} parent=55 // pred_check_branch
          %1213 = sbr.rel (%p1211) target = $region60
        $region59: #{tpu_custom_call.1} parent=55 // pred_region
          %s1214 = sand.u32 %s142, 1
          %s1215 = scalar_lea.sflag [#allocation4], %s1214
          %s1216 = sand.u32 %s142, 1
          %s1217 = smul.addr %s1216, 64
          %s1218 = scalar_lea.vmem [#allocation7], %s1217
          %1219 = dma.done %s1215, 1024
        $region60: #{tpu_custom_call.1} parent=55 // pred_fallthru
          _
      $region56: #{tpu_custom_call.1} parent=5 // pred_fallthru
        _
    $region6: #{tpu_custom_call.1} parent=1 // loop_footer
      %s22 = sadd.s32 1, %s18
    $region7: #{tpu_custom_call.1} parent=1 // loop_footer_branch
      %17 = sbr.rel target = $region3
    $region8: #{tpu_custom_call.1} parent=1 // loop_exit
      _
    %1220 = vsyncpa [#allocation3], 1
    %s1221 = scalar_lea.sflag [#allocation3], 1
    %1222 = vsyncpa %s1221, 1
    %1223 = vsyncpa [#allocation6], 1
    %1224 = vsyncpa [#allocation4], 1
    %s1225 = scalar_lea.sflag [#allocation4], 1
    %1226 = vsyncpa %s1225, 1

</llo_original>
